<compile_context>
chip_gen: v6e
topology: v6e:2x2x1
jax: 0.10.0
libtpu: 0.0.40
codegen_flags: <defaults>
</compile_context>

<pallas_src>
import functools

import jax
import jax.numpy as jnp
from jax import lax
from jax.experimental import pallas as pl
from jax.experimental.pallas import tpu as pltpu


def _round_up(n: int, m: int) -> int:
    return ((n + m - 1) // m) * m


def reward_kernel(s_ref, a_ref, w1s_ref, w1a_ref, vec_ref, out_ref):
    # s_ref:   (bb, L)  latent-state block
    # a_ref:   (bb, A)  latent-action block
    # w1s_ref: (L, L)   W1[:, :L].T  (state half, pre-transposed)
    # w1a_ref: (A, L)   W1[:, L:].T  (action half, pre-transposed)
    # vec_ref: (4, L)   rows: [b1, ln_gamma, ln_beta, w2_row]
    # out_ref: (bb, 1)
    v = vec_ref[...]
    b1 = v[0:1, :]
    gamma = v[1:2, :]
    beta = v[2:3, :]
    w2_row = v[3:4, :]

    # Linear 1 on the MXU, split over the concat axis (no HBM concat needed).
    h = (jnp.dot(s_ref[...], w1s_ref[...], preferred_element_type=jnp.float32)
         + jnp.dot(a_ref[...], w1a_ref[...], preferred_element_type=jnp.float32)
         + b1)

    # LayerNorm, one-pass statistics (biased variance, eps=1e-5, affine).
    inv_l = 1.0 / h.shape[-1]
    s1 = jnp.sum(h, axis=-1, keepdims=True)
    s2 = jnp.sum(h * h, axis=-1, keepdims=True)
    mean = s1 * inv_l
    var = jnp.maximum(s2 * inv_l - mean * mean, 0.0)
    hn = (h - mean) * lax.rsqrt(var + 1e-5)
    hn = hn * gamma + beta

    # Mish: x * tanh(softplus(x)), with tanh(softplus(x)) = e(e+2) / (e(e+2)+2),
    # e = exp(min(x, 20)). The clamp keeps e^2 finite; for x >= 20 the ratio is
    # 1.0 in f32 anyway. exp and the approximate reciprocal both go to the EUP.
    e = jnp.exp(jnp.minimum(hn, 20.0))
    num = e * (e + 2.0)
    t = num * pl.reciprocal(num + 2.0, approx=True)
    act = hn * t

    # Final Linear(L, 1, no bias) as VPU multiply + lane reduction.
    out_ref[...] = jnp.sum(act * w2_row, axis=-1, keepdims=True).astype(out_ref.dtype)


def init_params(key, latent_size, action_size, dtype=jnp.float32):
    """Deterministic, PyTorch-shaped parameter init (synthetic, not a checkpoint)."""
    k1, k2, k3 = jax.random.split(key, 3)
    in_f = latent_size + action_size
    bound1 = 1.0 / jnp.sqrt(in_f)
    bound2 = 1.0 / jnp.sqrt(latent_size)
    return {
        "w1": jax.random.uniform(k1, (latent_size, in_f), dtype, -bound1, bound1),
        "b1": jax.random.uniform(k2, (latent_size,), dtype, -bound1, bound1),
        "ln_gamma": jnp.ones((latent_size,), dtype),
        "ln_beta": jnp.zeros((latent_size,), dtype),
        "w2": jax.random.uniform(k3, (1, latent_size), dtype, -bound2, bound2),
    }


def make_reward_net_forward(params, *, block_b=256):
    """Pre-lays-out weights once; returns a jitted forward(latent_state, latent_action)."""
    L, in_f = params["w1"].shape
    A = in_f - L

    # One-time layout prep (eager here, never per call).
    w1 = params["w1"].astype(jnp.float32)
    w1s_t = jnp.asarray(w1[:, :L].T)                      # (L, L)
    w1a_t = jnp.asarray(w1[:, L:].T)                      # (A, L)
    vec = jnp.stack([
        params["b1"].astype(jnp.float32),
        params["ln_gamma"].astype(jnp.float32),
        params["ln_beta"].astype(jnp.float32),
        params["w2"].reshape(-1).astype(jnp.float32),
    ])                                                    # (4, L)

    @jax.jit
    def forward(latent_state, latent_action):
        B = latent_state.shape[0]
        # Sublane axis a multiple of 8; large batches tile across the grid and
        # the "parallel" axis shards across v7x's two TensorCores.
        bb = min(block_b, _round_up(B, 8))
        Bp = _round_up(B, bb)
        s = latent_state.astype(jnp.float32)
        a = latent_action.astype(jnp.float32)
        if Bp != B:
            s = jnp.pad(s, ((0, Bp - B), (0, 0)))
            a = jnp.pad(a, ((0, Bp - B), (0, 0)))

        out = pl.pallas_call(
            reward_kernel,
            out_shape=jax.ShapeDtypeStruct((Bp, 1), jnp.float32),
            grid=(Bp // bb,),
            in_specs=[
                pl.BlockSpec((bb, L), lambda i: (i, 0)),   # state block
                pl.BlockSpec((bb, A), lambda i: (i, 0)),   # action block
                pl.BlockSpec((L, L), lambda i: (0, 0)),    # W1 state half (resident)
                pl.BlockSpec((A, L), lambda i: (0, 0)),    # W1 action half (resident)
                pl.BlockSpec((4, L), lambda i: (0, 0)),    # [b1, gamma, beta, w2]
            ],
            out_specs=pl.BlockSpec((bb, 1), lambda i: (i, 0)),
            compiler_params=pltpu.CompilerParams(
                dimension_semantics=("parallel",)),
        )(s, a, w1s_t, w1a_t, vec)
        return out[:B]

    return forward


def reward_net_reference(latent_state, latent_action, params):
    """Pure-JAX reference mirroring the PyTorch forward exactly."""
    x = jnp.concatenate([latent_state, latent_action], axis=-1).astype(jnp.float32)
    h = x @ params["w1"].T + params["b1"]
    mean = jnp.mean(h, axis=-1, keepdims=True)
    var = jnp.mean(jnp.square(h - mean), axis=-1, keepdims=True)
    hn = (h - mean) / jnp.sqrt(var + 1e-5)
    hn = hn * params["ln_gamma"] + params["ln_beta"]
    act = hn * jnp.tanh(jax.nn.softplus(hn))
    return act @ params["w2"].T


if __name__ == "__main__":
    LATENT, ACTION, BATCH = 32, 8, 8

    key = jax.random.PRNGKey(0)
    k_params, k_state, k_action = jax.random.split(key, 3)

    params = init_params(k_params, LATENT, ACTION)
    latent_state = jax.random.normal(k_state, (BATCH, LATENT), jnp.float32)
    latent_action = jax.random.normal(k_action, (BATCH, ACTION), jnp.float32)

    forward = make_reward_net_forward(params)
    out = forward(latent_state, latent_action)
    out = jax.block_until_ready(out)

    ref = reward_net_reference(latent_state, latent_action, params)
    assert out.shape == (BATCH, 1), out.shape
    # Tolerance covers the approximate EUP reciprocal in the Mish rewrite;
    # all other math matches the reference in f32.
    assert jnp.allclose(out, ref, atol=2e-2, rtol=2e-2), (out, ref)

    print("KERNEL_OK")
</pallas_src>

<mosaic_0001>
module attributes {stable_mosaic.version = 11 : i64} {
  func.func @reward_kernel(%arg0: i32, %arg1: memref<8x32xf32, #tpu.memory_space<vmem>>, %arg2: memref<8x8xf32, #tpu.memory_space<vmem>>, %arg3: memref<32x32xf32, #tpu.memory_space<vmem>>, %arg4: memref<8x32xf32, #tpu.memory_space<vmem>>, %arg5: memref<4x32xf32, #tpu.memory_space<vmem>>, %arg6: memref<8x1xf32, #tpu.memory_space<vmem>>) attributes {dimension_semantics = [#tpu.dimension_semantics<parallel>], iteration_bounds = array<i64: 1>, scalar_prefetch = 0 : i64, scratch_operands = 0 : i64, tpu.core_type = #tpu.core_type<tc>, window_params = [{transform_indices = @transform_0, window_bounds = array<i64: 8, 32>}, {transform_indices = @transform_1, window_bounds = array<i64: 8, 8>}, {pipeline_mode = #tpu.pipeline_mode<synchronous>, transform_indices = @transform_2, window_bounds = array<i64: 32, 32>}, {pipeline_mode = #tpu.pipeline_mode<synchronous>, transform_indices = @transform_3, window_bounds = array<i64: 8, 32>}, {pipeline_mode = #tpu.pipeline_mode<synchronous>, transform_indices = @transform_4, window_bounds = array<i64: 4, 32>}, {transform_indices = @transform_5, window_bounds = array<i64: 8, 1>}]} {
    %c0 = arith.constant 0 : index
    %c0_0 = arith.constant 0 : index
    %0 = vector.load %arg5[%c0, %c0_0] : memref<4x32xf32, #tpu.memory_space<vmem>>, vector<4x32xf32>
    %1 = vector.extract_strided_slice %0 {offsets = [0, 0], sizes = [1, 32], strides = [1, 1]} : vector<4x32xf32> to vector<1x32xf32>
    %2 = vector.extract_strided_slice %0 {offsets = [1, 0], sizes = [1, 32], strides = [1, 1]} : vector<4x32xf32> to vector<1x32xf32>
    %3 = vector.extract_strided_slice %0 {offsets = [2, 0], sizes = [1, 32], strides = [1, 1]} : vector<4x32xf32> to vector<1x32xf32>
    %4 = vector.extract_strided_slice %0 {offsets = [3, 0], sizes = [1, 32], strides = [1, 1]} : vector<4x32xf32> to vector<1x32xf32>
    %c0_1 = arith.constant 0 : index
    %c0_2 = arith.constant 0 : index
    %5 = vector.load %arg1[%c0_1, %c0_2] : memref<8x32xf32, #tpu.memory_space<vmem>>, vector<8x32xf32>
    %c0_3 = arith.constant 0 : index
    %c0_4 = arith.constant 0 : index
    %6 = vector.load %arg3[%c0_3, %c0_4] : memref<32x32xf32, #tpu.memory_space<vmem>>, vector<32x32xf32>
    %cst = arith.constant dense<0.000000e+00> : vector<8x32xf32>
    %7 = tpu.matmul %5, %6, %cst {dimension_numbers = #tpu.dot_dimension_numbers<[1], [0], [0], [1], [0, 0, 1, 1], [], []>} : vector<8x32xf32>, vector<32x32xf32>, vector<8x32xf32> -> vector<8x32xf32>
    %c0_5 = arith.constant 0 : index
    %c0_6 = arith.constant 0 : index
    %8 = vector.load %arg2[%c0_5, %c0_6] : memref<8x8xf32, #tpu.memory_space<vmem>>, vector<8x8xf32>
    %c0_7 = arith.constant 0 : index
    %c0_8 = arith.constant 0 : index
    %9 = vector.load %arg4[%c0_7, %c0_8] : memref<8x32xf32, #tpu.memory_space<vmem>>, vector<8x32xf32>
    %cst_9 = arith.constant dense<0.000000e+00> : vector<8x32xf32>
    %10 = tpu.matmul %8, %9, %cst_9 {dimension_numbers = #tpu.dot_dimension_numbers<[1], [0], [0], [1], [0, 0, 1, 1], [], []>} : vector<8x8xf32>, vector<8x32xf32>, vector<8x32xf32> -> vector<8x32xf32>
    %11 = arith.addf %7, %10 : vector<8x32xf32>
    %12 = vector.broadcast %1 : vector<1x32xf32> to vector<8x32xf32>
    %13 = arith.addf %11, %12 : vector<8x32xf32>
    %cst_10 = arith.constant dense<0.000000e+00> : vector<8xf32>
    %14 = vector.multi_reduction <add>, %13, %cst_10 [1] : vector<8x32xf32> to vector<8xf32>
    %15 = vector.shape_cast %14 : vector<8xf32> to vector<8x1xf32>
    %16 = arith.mulf %13, %13 : vector<8x32xf32>
    %cst_11 = arith.constant dense<0.000000e+00> : vector<8xf32>
    %17 = vector.multi_reduction <add>, %16, %cst_11 [1] : vector<8x32xf32> to vector<8xf32>
    %18 = vector.shape_cast %17 : vector<8xf32> to vector<8x1xf32>
    %cst_12 = arith.constant 3.125000e-02 : f32
    %19 = vector.broadcast %cst_12 : f32 to vector<8x1xf32>
    %20 = arith.mulf %15, %19 : vector<8x1xf32>
    %cst_13 = arith.constant 3.125000e-02 : f32
    %21 = vector.broadcast %cst_13 : f32 to vector<8x1xf32>
    %22 = arith.mulf %18, %21 : vector<8x1xf32>
    %23 = arith.mulf %20, %20 : vector<8x1xf32>
    %24 = arith.subf %22, %23 : vector<8x1xf32>
    %cst_14 = arith.constant 0.000000e+00 : f32
    %25 = vector.broadcast %cst_14 : f32 to vector<8x1xf32>
    %26 = arith.maximumf %24, %25 : vector<8x1xf32>
    %27 = vector.broadcast %20 : vector<8x1xf32> to vector<8x32xf32>
    %28 = arith.subf %13, %27 : vector<8x32xf32>
    %cst_15 = arith.constant 9.99999974E-6 : f32
    %29 = vector.broadcast %cst_15 : f32 to vector<8x1xf32>
    %30 = arith.addf %26, %29 : vector<8x1xf32>
    %31 = math.rsqrt %30 : vector<8x1xf32>
    %32 = vector.broadcast %31 : vector<8x1xf32> to vector<8x32xf32>
    %33 = arith.mulf %28, %32 : vector<8x32xf32>
    %34 = vector.broadcast %2 : vector<1x32xf32> to vector<8x32xf32>
    %35 = arith.mulf %33, %34 : vector<8x32xf32>
    %36 = vector.broadcast %3 : vector<1x32xf32> to vector<8x32xf32>
    %37 = arith.addf %35, %36 : vector<8x32xf32>
    %cst_16 = arith.constant 2.000000e+01 : f32
    %38 = vector.broadcast %cst_16 : f32 to vector<8x32xf32>
    %39 = arith.minimumf %37, %38 : vector<8x32xf32>
    %40 = math.exp %39 : vector<8x32xf32>
    %cst_17 = arith.constant 2.000000e+00 : f32
    %41 = vector.broadcast %cst_17 : f32 to vector<8x32xf32>
    %42 = arith.addf %40, %41 : vector<8x32xf32>
    %43 = arith.mulf %40, %42 : vector<8x32xf32>
    %cst_18 = arith.constant 2.000000e+00 : f32
    %44 = vector.broadcast %cst_18 : f32 to vector<8x32xf32>
    %45 = arith.addf %43, %44 : vector<8x32xf32>
    %46 = tpu.reciprocal %45 {approx = true} : vector<8x32xf32> -> vector<8x32xf32>
    %47 = arith.mulf %43, %46 : vector<8x32xf32>
    %48 = arith.mulf %37, %47 : vector<8x32xf32>
    %49 = vector.broadcast %4 : vector<1x32xf32> to vector<8x32xf32>
    %50 = arith.mulf %48, %49 : vector<8x32xf32>
    %cst_19 = arith.constant dense<0.000000e+00> : vector<8xf32>
    %51 = vector.multi_reduction <add>, %50, %cst_19 [1] : vector<8x32xf32> to vector<8xf32>
    %52 = vector.shape_cast %51 : vector<8xf32> to vector<8x1xf32>
    %c0_20 = arith.constant 0 : index
    %c0_21 = arith.constant 0 : index
    %53 = vector.load %arg6[%c0_20, %c0_21] : memref<8x1xf32, #tpu.memory_space<vmem>>, vector<8x1xf32>
    tpu.vector_store %arg6[%c0_20, %c0_21], %52 {strides = array<i32>} : memref<8x1xf32, #tpu.memory_space<vmem>>, vector<8x1xf32>,
    return
  }
  func.func @transform_0(%arg0: i32) -> (i32, i32) {
    %c0_i32 = arith.constant 0 : i32
    %c0_i32_0 = arith.constant 0 : i32
    return %arg0, %c0_i32 : i32, i32
  }
  func.func @transform_1(%arg0: i32) -> (i32, i32) {
    %c0_i32 = arith.constant 0 : i32
    %c0_i32_0 = arith.constant 0 : i32
    return %arg0, %c0_i32 : i32, i32
  }
  func.func @transform_2(%arg0: i32) -> (i32, i32) {
    %c0_i32 = arith.constant 0 : i32
    %c0_i32_0 = arith.constant 0 : i32
    %c0_i32_1 = arith.constant 0 : i32
    return %c0_i32, %c0_i32_0 : i32, i32
  }
  func.func @transform_3(%arg0: i32) -> (i32, i32) {
    %c0_i32 = arith.constant 0 : i32
    %c0_i32_0 = arith.constant 0 : i32
    %c0_i32_1 = arith.constant 0 : i32
    return %c0_i32, %c0_i32_0 : i32, i32
  }
  func.func @transform_4(%arg0: i32) -> (i32, i32) {
    %c0_i32 = arith.constant 0 : i32
    %c0_i32_0 = arith.constant 0 : i32
    %c0_i32_1 = arith.constant 0 : i32
    return %c0_i32, %c0_i32_0 : i32, i32
  }
  func.func @transform_5(%arg0: i32) -> (i32, i32) {
    %c0_i32 = arith.constant 0 : i32
    %c0_i32_0 = arith.constant 0 : i32
    return %arg0, %c0_i32 : i32, i32
  }
}

</mosaic_0001>

<llo_original>
// kernel: forward.1
$region0: #{forward.1}
  #allocation0 [shape = 'u32[]', space=smem, size = 0x4, offset = 0x4, fixed_abs, tag = 'smem constant byte address 0x4 - core index']
  #allocation1 [shape = 'u32[144,128]{1,0:T(1,128)}', space=vmem, size = 0x12000, scoped, tag = 'internal scratch']
  %s0 = inlined_call_operand.hbm [shape: f32[8,32], index: 0, kind: input, shape index: {}]
  %s1 = inlined_call_operand.hbm [shape: f32[8,8], index: 1, kind: input, shape index: {}]
  %s2 = inlined_call_operand.hbm [shape: f32[32,32], index: 2, kind: input, shape index: {}]
  %s3 = inlined_call_operand.hbm [shape: f32[8,32], index: 3, kind: input, shape index: {}]
  %s4 = inlined_call_operand.vmem [shape: f32[4,32], index: 4, kind: input, shape index: {}]
  %s5 = inlined_call_operand.vmem [shape: f32[8,1], index: 5, kind: output, shape index: {}]
  %s6 = sld [smem:[#allocation0]]
  $region46: #{forward.1} parent=0
    _
  %s8 = ssub.s32 1, %s6
  %s9 = scalar_select 0, %s8, %s6
  $region1: #{forward.1} parent=0
    #allocation2 [shape = 'u8[4096]{0}', space=vmem, size = 0x1000, scoped, tag = 'input window, operand 0, single buffered']
    #allocation3 [shape = 's32[1]{0}', space=sflag, size = 0x4, scoped, tag = 'scoped memory for forward.1']
    #allocation4 [shape = 'u8[4096]{0}', space=vmem, size = 0x1000, scoped, tag = 'input window, operand 1, single buffered']
    #allocation5 [shape = 's32[1]{0}', space=sflag, size = 0x4, scoped, tag = 'scoped memory for forward.1']
    #allocation6 [shape = 'u8[16384]{0}', space=vmem, size = 0x4000, scoped, tag = 'input window, operand 2, single buffered']
    #allocation7 [shape = 'u8[4096]{0}', space=vmem, size = 0x1000, scoped, tag = 'input window, operand 3, single buffered']
    #allocation8 [shape = 's32[1]{0}', space=sflag, size = 0x4, scoped, tag = 'scoped memory for forward.1']
    %10 = vsyncpa [#allocation3], 0
    %11 = vsyncpa [#allocation5], 0
    %12 = vsyncpa [#allocation8], 0
    // Predicated region
    $region2: #{forward.1} parent=1 // pred_check
      _
    $region3: #{forward.1} parent=1 // pred_check_branch
      %14 = sbr.rel (0) target = $region5
    $region4: #{forward.1} parent=1 // pred_region
      %s16 = ssub.s32 128, 128
      %17 = vsyncadd [#allocation3], %s16
      %s19 = sshll.u32 [#allocation2], 4
      %s20 = int_to_ptr.vmem [resolvable:$true] %s19
      %22 = dma.hbm_to_vmem [thread:$0]  %s0, 128, %s20, [#allocation3]
    $region5: #{forward.1} parent=1 // pred_fallthru
      _
    // Predicated region
    $region6: #{forward.1} parent=1 // pred_check
      _
    $region7: #{forward.1} parent=1 // pred_check_branch
      %24 = sbr.rel (0) target = $region9
    $region8: #{forward.1} parent=1 // pred_region
      %s26 = ssub.s32 128, 128
      %27 = vsyncadd [#allocation5], %s26
      %s29 = sshll.u32 [#allocation4], 4
      %s30 = int_to_ptr.vmem [resolvable:$true] %s29
      %32 = dma.hbm_to_vmem [thread:$0]  %s1, 128, %s30, [#allocation5]
    $region9: #{forward.1} parent=1 // pred_fallthru
      _
    // Predicated region
    $region10: #{forward.1} parent=1 // pred_check
      _
    $region11: #{forward.1} parent=1 // pred_check_branch
      %34 = sbr.rel (0) target = $region13
    $region12: #{forward.1} parent=1 // pred_region
      %s36 = ssub.s32 512, 512
      %37 = vsyncadd [#allocation5], %s36
      %s38 = sshll.u32 [#allocation6], 4
      %s39 = int_to_ptr.vmem [resolvable:$true] %s38
      %44 = dma.hbm_to_vmem [thread:$0]  %s2, 512, %s39, [#allocation5], 128, 128, 8
    $region13: #{forward.1} parent=1 // pred_fallthru
      _
    // Predicated region
    $region14: #{forward.1} parent=1 // pred_check
      _
    $region15: #{forward.1} parent=1 // pred_check_branch
      %46 = sbr.rel (0) target = $region17
    $region16: #{forward.1} parent=1 // pred_region
      %s48 = ssub.s32 128, 128
      %49 = vsyncadd [#allocation8], %s48
      %s51 = sshll.u32 [#allocation7], 4
      %s52 = int_to_ptr.vmem [resolvable:$true] %s51
      %54 = dma.hbm_to_vmem [thread:$0]  %s3, 128, %s52, [#allocation8]
    $region17: #{forward.1} parent=1 // pred_fallthru
      _
    // Predicated region
    $region18: #{forward.1} parent=1 // pred_check
      _
    $region19: #{forward.1} parent=1 // pred_check_branch
      %56 = sbr.rel (0) target = $region21
    $region20: #{forward.1} parent=1 // pred_region
      _
    $region21: #{forward.1} parent=1 // pred_fallthru
      _
    // Predicated region
    $region22: #{forward.1} parent=1 // pred_check
      _
    $region23: #{forward.1} parent=1 // pred_check_branch
      %58 = sbr.rel (0) target = $region25
    $region24: #{forward.1} parent=1 // pred_region
      %59 = dma.done [#allocation3], 128
    $region25: #{forward.1} parent=1 // pred_fallthru
      _
    // Predicated region
    $region26: #{forward.1} parent=1 // pred_check
      _
    $region27: #{forward.1} parent=1 // pred_check_branch
      %61 = sbr.rel (0) target = $region29
    $region28: #{forward.1} parent=1 // pred_region
      %62 = dma.done [#allocation5], 128
    $region29: #{forward.1} parent=1 // pred_fallthru
      _
    // Predicated region
    $region30: #{forward.1} parent=1 // pred_check
      _
    $region31: #{forward.1} parent=1 // pred_check_branch
      %64 = sbr.rel (0) target = $region33
    $region32: #{forward.1} parent=1 // pred_region
      %65 = dma.done [#allocation5], 512
    $region33: #{forward.1} parent=1 // pred_fallthru
      _
    // Predicated region
    $region34: #{forward.1} parent=1 // pred_check
      _
    $region35: #{forward.1} parent=1 // pred_check_branch
      %67 = sbr.rel (0) target = $region37
    $region36: #{forward.1} parent=1 // pred_region
      %68 = dma.done [#allocation8], 128
    $region37: #{forward.1} parent=1 // pred_fallthru
      _
    %v69 = vld [vmem:[%s4] sm:$0xf]
    %v70 = vld [vmem:[#allocation2] sm:$0xff]
    %v71 = vld [vmem:[#allocation6] sm:$0xff]
    %v72 = vld [vmem:[#allocation6 + $0x8] sm:$0xff]
    %v73 = vld [vmem:[#allocation6 + $0x10] sm:$0xff]
    %v74 = vld [vmem:[#allocation6 + $0x18] sm:$0xff]
    %v75 = vld [vmem:[#allocation4] sm:$0xff]
    %v76 = vld [vmem:[#allocation7] sm:$0xff]
    %vm77 = vcmask 64512
    %v79 = vsel %vm77, %v75, 0
    %81 = vmatprep.subr.mxu0 0.0
    %82 = vmatpush1.msra.mxu0 0.0
    %83 = vmatprep.subr.mxu0 0.0
    %84 = vmatpush1.msra.mxu0 0.0
    %85 = vmatprep.subr.mxu0 0.0
    %86 = vmatpush1.msra.mxu0 0.0
    %87 = vmatprep.subr.mxu0 0.0
    %88 = vmatpush1.msra.mxu0 0.0
    %89 = vmatprep.subr.mxu0 0.0
    %90 = vmatpush1.msra.mxu0 0.0
    %91 = vmatprep.subr.mxu0 0.0
    %92 = vmatpush1.msra.mxu0 0.0
    %93 = vmatprep.subr.mxu0 0.0
    %94 = vmatpush1.msra.mxu0 0.0
    %95 = vmatprep.subr.mxu0 0.0
    %96 = vmatpush1.msra.mxu0 0.0
    %97 = vmatprep.subr.mxu0 0.0
    %98 = vmatpush1.msra.mxu0 0.0
    %99 = vmatprep.subr.mxu0 0.0
    %100 = vmatpush1.msra.mxu0 0.0
    %101 = vmatprep.subr.mxu0 0.0
    %102 = vmatpush1.msra.mxu0 0.0
    %103 = vmatprep.subr.mxu0 0.0
    %104 = vmatpush1.msra.mxu0 0.0
    %105 = vmatprep.subr.mxu0 0.0
    %106 = vmatpush1.msra.mxu0 0.0
    %107 = vmatprep.subr.mxu0 0.0
    %108 = vmatpush1.msra.mxu0 0.0
    %109 = vmatprep.subr.mxu0 0.0
    %110 = vmatpush1.msra.mxu0 0.0
    %111 = vmatprep.subr.mxu0 0.0
    %112 = vmatpush1.msra.mxu0 %v76
    %113 = vmatprep.subr.mxu0 0.0
    %114 = vmatpush2.msra.mxu0 0.0
    %115 = vmatprep.subr.mxu0 0.0
    %116 = vmatpush2.msra.mxu0 0.0
    %117 = vmatprep.subr.mxu0 0.0
    %118 = vmatpush2.msra.mxu0 0.0
    %119 = vmatprep.subr.mxu0 0.0
    %120 = vmatpush2.msra.mxu0 0.0
    %121 = vmatprep.subr.mxu0 0.0
    %122 = vmatpush2.msra.mxu0 0.0
    %123 = vmatprep.subr.mxu0 0.0
    %124 = vmatpush2.msra.mxu0 0.0
    %125 = vmatprep.subr.mxu0 0.0
    %126 = vmatpush2.msra.mxu0 0.0
    %127 = vmatprep.subr.mxu0 0.0
    %128 = vmatpush2.msra.mxu0 0.0
    %129 = vmatprep.subr.mxu0 0.0
    %130 = vmatpush2.msra.mxu0 0.0
    %131 = vmatprep.subr.mxu0 0.0
    %132 = vmatpush2.msra.mxu0 0.0
    %133 = vmatprep.subr.mxu0 0.0
    %134 = vmatpush2.msra.mxu0 0.0
    %135 = vmatprep.subr.mxu0 0.0
    %136 = vmatpush2.msra.mxu0 0.0
    %137 = vmatprep.subr.mxu0 0.0
    %138 = vmatpush2.msra.mxu0 0.0
    %139 = vmatprep.subr.mxu0 0.0
    %140 = vmatpush2.msra.mxu0 0.0
    %141 = vmatprep.subr.mxu0 0.0
    %142 = vmatpush2.msra.mxu0 0.0
    %143 = vmatprep.subr.mxu0 0.0
    %144 = vmatpush2.msra.mxu0 0.0
    %145 = vmatprep.mubr.f32.mxu0 0.0
    %146 = vmatmul.mubr.f32.gmra.mxu0 %v79
    %v147 = vpop.f32.mrf.mxu0
    %v148 = vadd.f32 0.0, %v147
    %v149 = vpop.f32.mrf.mxu0
    %150 = vdwg.mxu0
    %vm151 = vcmask 261120
    %v153 = vsel %vm151, %v70, 0
    %155 = vmatprep.subr.mxu0 0.0
    %156 = vmatpush1.msra.mxu0 0.0
    %157 = vmatprep.subr.mxu0 0.0
    %158 = vmatpush1.msra.mxu0 0.0
    %159 = vmatprep.subr.mxu0 0.0
    %160 = vmatpush1.msra.mxu0 0.0
    %161 = vmatprep.subr.mxu0 0.0
    %162 = vmatpush1.msra.mxu0 0.0
    %163 = vmatprep.subr.mxu0 0.0
    %164 = vmatpush1.msra.mxu0 0.0
    %165 = vmatprep.subr.mxu0 0.0
    %166 = vmatpush1.msra.mxu0 0.0
    %167 = vmatprep.subr.mxu0 0.0
    %168 = vmatpush1.msra.mxu0 0.0
    %169 = vmatprep.subr.mxu0 0.0
    %170 = vmatpush1.msra.mxu0 0.0
    %171 = vmatprep.subr.mxu0 0.0
    %172 = vmatpush1.msra.mxu0 0.0
    %173 = vmatprep.subr.mxu0 0.0
    %174 = vmatpush1.msra.mxu0 0.0
    %175 = vmatprep.subr.mxu0 0.0
    %176 = vmatpush1.msra.mxu0 0.0
    %177 = vmatprep.subr.mxu0 0.0
    %178 = vmatpush1.msra.mxu0 0.0
    %179 = vmatprep.subr.mxu0 0.0
    %180 = vmatpush1.msra.mxu0 %v74
    %181 = vmatprep.subr.mxu0 0.0
    %182 = vmatpush1.msra.mxu0 %v73
    %183 = vmatprep.subr.mxu0 0.0
    %184 = vmatpush1.msra.mxu0 %v72
    %185 = vmatprep.subr.mxu0 0.0
    %186 = vmatpush1.msra.mxu0 %v71
    %187 = vmatprep.subr.mxu0 0.0
    %188 = vmatpush2.msra.mxu0 0.0
    %189 = vmatprep.subr.mxu0 0.0
    %190 = vmatpush2.msra.mxu0 0.0
    %191 = vmatprep.subr.mxu0 0.0
    %192 = vmatpush2.msra.mxu0 0.0
    %193 = vmatprep.subr.mxu0 0.0
    %194 = vmatpush2.msra.mxu0 0.0
    %195 = vmatprep.subr.mxu0 0.0
    %196 = vmatpush2.msra.mxu0 0.0
    %197 = vmatprep.subr.mxu0 0.0
    %198 = vmatpush2.msra.mxu0 0.0
    %199 = vmatprep.subr.mxu0 0.0
    %200 = vmatpush2.msra.mxu0 0.0
    %201 = vmatprep.subr.mxu0 0.0
    %202 = vmatpush2.msra.mxu0 0.0
    %203 = vmatprep.subr.mxu0 0.0
    %204 = vmatpush2.msra.mxu0 0.0
    %205 = vmatprep.subr.mxu0 0.0
    %206 = vmatpush2.msra.mxu0 0.0
    %207 = vmatprep.subr.mxu0 0.0
    %208 = vmatpush2.msra.mxu0 0.0
    %209 = vmatprep.subr.mxu0 0.0
    %210 = vmatpush2.msra.mxu0 0.0
    %211 = vmatprep.subr.mxu0 0.0
    %212 = vmatpush2.msra.mxu0 0.0
    %213 = vmatprep.subr.mxu0 0.0
    %214 = vmatpush2.msra.mxu0 0.0
    %215 = vmatprep.subr.mxu0 0.0
    %216 = vmatpush2.msra.mxu0 0.0
    %217 = vmatprep.subr.mxu0 0.0
    %218 = vmatpush2.msra.mxu0 0.0
    %219 = vmatprep.mubr.f32.mxu0 0.0
    %220 = vmatmul.mubr.f32.gmra.mxu0 %v153
    %v221 = vpop.f32.mrf.mxu0
    %v222 = vadd.f32 %v148, %v221
    %v223 = vpop.f32.mrf.mxu0
    %224 = vdwg.mxu0
    %v225 = vlaneseq
    %v226 = vshrl.u32 %v225, 7
    %v227 = vsub.s32 0, %v226
    %v228 = vrot.slane %v69, %v227
    %v229 = vadd.f32 %v222, %v228
    %v230 = vsel %vm151, %v229, 0.0
    %231 = vadd.xlane.f32.xlu0 %v230
    %v232 = vpop.xlane.xlu0 %231
    %v233 = vmul.f32 %v229, %v229
    %v234 = vsel %vm151, %v233, 0.0
    %235 = vadd.xlane.f32.xlu0 %v234
    %v236 = vpop.xlane.xlu0 %235
    %v237 = vmul.f32 %v232, 0.03125
    %v238 = vmul.f32 %v236, 0.03125
    %v239 = vmul.f32 %v237, %v237
    %v240 = vsub.f32 %v238, %v239
    %v241 = vmax.f32 %v240, 0.0
    %v242 = vsub.f32 %v229, %v237
    %v243 = vadd.f32 %v241, 1e-05
    %v244 = vrsqrt.pop %v243
    %v245 = vmul.f32 %v242, %v244
    %v246 = vlaneseq
    %v247 = vshrl.u32 %v246, 7
    %v248 = vsub.s32 1, %v247
    %v249 = vrot.slane %v69, %v248
    %v250 = vmul.f32 %v245, %v249
    %v251 = vlaneseq
    %v252 = vshrl.u32 %v251, 7
    %v253 = vsub.s32 2, %v252
    %v254 = vrot.slane %v69, %v253
    %v255 = vadd.f32 %v250, %v254
    %v256 = vmin.f32 %v255, 20.0
    %v257 = vmul.f32 %v256, 1.442695
    %v258 = vpow.pop %v257
    %v259 = vadd.f32 %v258, 2.0
    %v260 = vmul.f32 %v258, %v259
    %v261 = vadd.f32 %v260, 2.0
    %v262 = vrcp.pop %v261
    %v263 = vmul.f32 %v260, %v262
    %v264 = vmul.f32 %v255, %v263
    %v265 = vlaneseq
    %v266 = vshrl.u32 %v265, 7
    %v267 = vsub.s32 3, %v266
    %v268 = vrot.slane %v69, %v267
    %v269 = vmul.f32 %v264, %v268
    %v270 = vsel %vm151, %v269, 0.0
    %271 = vadd.xlane.f32.xlu0 %v270
    %v272 = vpop.xlane.xlu0 %271
    %vm273 = vcmask 7168
    %274 = vst.msk [vmem:[%s5] sm:$0xff] %vm273, %v272
    // Predicated region
    $region38: #{forward.1} parent=1 // pred_check
      _
    $region39: #{forward.1} parent=1 // pred_check_branch
      %276 = sbr.rel (0) target = $region41
    $region40: #{forward.1} parent=1 // pred_region
      _
    $region41: #{forward.1} parent=1 // pred_fallthru
      _
    // Predicated region
    $region42: #{forward.1} parent=1 // pred_check
      _
    $region43: #{forward.1} parent=1 // pred_check_branch
      %278 = sbr.rel (0) target = $region45
    $region44: #{forward.1} parent=1 // pred_region
      _
    $region45: #{forward.1} parent=1 // pred_fallthru
      _
    %279 = vsyncpa [#allocation3], 1
    %280 = vsyncpa [#allocation5], 1
    %281 = vsyncpa [#allocation8], 1

</llo_original>
